<compile_context>
chip_gen: v5e
topology: v5e:2x2
jax: 0.10.0
libtpu: 0.0.40
codegen_flags: <defaults>
</compile_context>

<pallas_src>
import functools
import math

import jax
import jax.numpy as jnp
from jax.experimental import pallas as pl
from jax.experimental.pallas import tpu as pltpu

EPS = 1e-5


def _weighted_sum_kernel(w_ref, *refs, n_weights, normalize):
    # w_ref: SMEM (N,) float32 — softmaxed weights (scalar prefetch).
    # refs:  N input blocks (TR, C), then the output block (TR, C).
    x_refs = refs[:n_weights]
    o_ref = refs[n_weights]

    acc = None
    for i in range(n_weights):                       # N is small & static: unrolled
        xi = x_refs[i][...].astype(jnp.float32)      # (TR, C)
        if normalize:
            mu = jnp.mean(xi, axis=-1, keepdims=True)
            xc = xi - mu
            var = jnp.mean(xc * xc, axis=-1, keepdims=True)   # two-pass: >= 0
            # Fold the softmax weight into the per-row scale: a (TR,1) op
            # instead of an extra full (TR,C) multiply per input.
            scale = w_ref[i] * jax.lax.rsqrt(var + EPS)
            term = xc * scale
        else:
            term = w_ref[i] * xi                     # scalar * block (VPU splat)
        acc = term if acc is None else acc + term
    o_ref[...] = acc.astype(o_ref.dtype)


def _cdiv(a, b):
    return -(-a // b)


def _round_up(x, m):
    return _cdiv(x, m) * m


def _vmem_capacity_bytes():
    """Physical VMEM per TensorCore; conservative fallback (v7x = 64 MiB)."""
    try:
        return int(pltpu.get_tpu_info().vmem_capacity_bytes)
    except Exception:
        return 64 * 1024 * 1024


def _choose_row_tile(R, C, n, itemsize, vmem_cap):
    """Pick TR: a multiple of 8 (or R for a single full-dim block) such that
    the double-buffered footprint 2*(n+1)*TR*C*itemsize stays within ~60% of
    physical VMEM, preferring an even grid of >=2 (ideally >=4) steps so both
    v7x TensorCores get balanced work."""
    if R <= 8:
        return R

    per_row = (n + 1) * C * itemsize
    budget = int(vmem_cap * 0.6)
    max_tr = max(8, (budget // (2 * per_row)) // 8 * 8)

    tr = None
    for steps in (4, 2):                 # small even grids when data is small
        if R >= steps * 8:
            tr = min(max_tr, _round_up(_cdiv(R, steps), 8))
            break
    if tr is None:
        tr = min(max_tr, _round_up(R, 8))

    nsteps = _cdiv(R, tr)
    if nsteps <= 1:
        return R                         # single full-dim block is always legal

    if nsteps % 2:                       # prefer an even step count (2 TCs)
        for s in range(nsteps + 1, nsteps + 9, 2):
            cand = _round_up(_cdiv(R, s), 8)
            if 0 < cand <= max_tr and _cdiv(R, cand) % 2 == 0:
                tr = cand
                break
    return max(8, tr)


def weighted_sum_layer(xs, weights, normalize_features=False):
    """xs: list of N arrays, all of identical shape (..., H); weights: (N,)."""
    n = len(xs)
    assert weights.shape == (n,)
    orig_shape = xs[0].shape
    out_dtype = xs[0].dtype

    # softmax over N learnable weights (tiny; done in the wrapper) -> SMEM
    w = jax.nn.softmax(weights.astype(jnp.float32), axis=0)

    total = math.prod(orig_shape)
    pad = 0
    if normalize_features:
        # layer_norm is over the last dim -> it must stay the (full) lane axis
        C = orig_shape[-1]
        R = total // C
        xs2 = [x.reshape(R, C) for x in xs]
        # TODO(synk): for H < 128 on v7x, pack 128//H feature groups per lane
        # row (block-diag group reduce) to restore lane density.
    else:
        # purely elementwise: flatten to a lane-dense 2-D layout; pad to a
        # lane multiple when the size is awkward (never a (1, total) block)
        if total < 128:
            C = total
        else:
            C = next((c for c in (1024, 512, 256, 128) if total % c == 0), 1024)
            pad = (-total) % C
        if pad:
            xs2 = [jnp.pad(x.reshape(-1), (0, pad)).reshape(-1, C) for x in xs]
        else:
            xs2 = [x.reshape(-1, C) for x in xs]
        R = (total + pad) // C

    itemsize = max(jnp.dtype(x.dtype).itemsize for x in xs)
    itemsize = max(itemsize, jnp.dtype(out_dtype).itemsize)
    vmem_cap = _vmem_capacity_bytes()
    TR = _choose_row_tile(R, C, n, itemsize, vmem_cap)
    grid = (_cdiv(R, TR),)

    # Scoped VMEM limit sized for the double-buffered pipeline footprint,
    # with headroom, never exceeding ~90% of physical VMEM.
    footprint = 2 * (n + 1) * TR * C * itemsize
    vmem_limit = int(min(vmem_cap * 9 // 10,
                         max(footprint + footprint // 2, 32 * 1024 * 1024)))

    def idx_map(i, w_ref):                           # scalar-prefetch ref is positional
        return (i, 0)

    block = pl.BlockSpec((TR, C), idx_map)

    kernel = functools.partial(
        _weighted_sum_kernel, n_weights=n, normalize=normalize_features)

    out2 = pl.pallas_call(
        kernel,
        out_shape=jax.ShapeDtypeStruct((R, C), out_dtype),
        grid_spec=pltpu.PrefetchScalarGridSpec(
            num_scalar_prefetch=1,                   # w -> SMEM
            grid=grid,
            in_specs=[block] * n,
            out_specs=block,
        ),
        compiler_params=pltpu.CompilerParams(
            dimension_semantics=("parallel",),
            vmem_limit_bytes=vmem_limit,
        ),
    )(w, *xs2)

    if pad:
        return out2.reshape(-1)[:total].reshape(orig_shape)
    return out2.reshape(orig_shape)


def _reference(xs, weights, normalize_features=False):
    """Pure-JAX reference matching the PyTorch forward."""
    w = jax.nn.softmax(weights.astype(jnp.float32), axis=0)
    x = jnp.stack([t.astype(jnp.float32) for t in xs], axis=0)
    if normalize_features:
        mu = jnp.mean(x, axis=-1, keepdims=True)
        var = jnp.mean((x - mu) ** 2, axis=-1, keepdims=True)
        x = (x - mu) / jnp.sqrt(var + EPS)
    wshape = (len(xs),) + (1,) * (x.ndim - 1)
    return jnp.sum(w.reshape(wshape) * x, axis=0).astype(xs[0].dtype)


if __name__ == "__main__":
    key = jax.random.PRNGKey(0)
    n_weights, bsz, seq, hidden = 4, 2, 8, 32
    keys = jax.random.split(key, n_weights + 1)

    xs = [jax.random.normal(keys[i], (bsz, seq, hidden), dtype=jnp.float32)
          for i in range(n_weights)]
    weights = jax.random.normal(keys[-1], (n_weights,), dtype=jnp.float32) * 0.5

    for norm in (False, True):
        out = weighted_sum_layer(xs, weights, normalize_features=norm)
        out = jax.block_until_ready(out)
        ref = _reference(xs, weights, normalize_features=norm)
        assert out.shape == (bsz, seq, hidden)
        assert jnp.allclose(out, ref, atol=1e-4, rtol=1e-4), \
            f"mismatch vs reference (normalize_features={norm})"

    print("KERNEL_OK")
</pallas_src>

<mosaic_0001>
module attributes {stable_mosaic.version = 11 : i64} {
  func.func @_weighted_sum_kernel(%arg0: i32, %arg1: memref<4xf32, #tpu.memory_space<smem>>, %arg2: memref<1x512xf32, #tpu.memory_space<vmem>>, %arg3: memref<1x512xf32, #tpu.memory_space<vmem>>, %arg4: memref<1x512xf32, #tpu.memory_space<vmem>>, %arg5: memref<1x512xf32, #tpu.memory_space<vmem>>, %arg6: memref<1x512xf32, #tpu.memory_space<vmem>>) attributes {dimension_semantics = [#tpu.dimension_semantics<parallel>], iteration_bounds = array<i64: 1>, scalar_prefetch = 1 : i64, scratch_operands = 0 : i64, tpu.core_type = #tpu.core_type<tc>, window_params = [{transform_indices = @transform_0, window_bounds = array<i64: 1, 512>}, {transform_indices = @transform_1, window_bounds = array<i64: 1, 512>}, {transform_indices = @transform_2, window_bounds = array<i64: 1, 512>}, {transform_indices = @transform_3, window_bounds = array<i64: 1, 512>}, {transform_indices = @transform_4, window_bounds = array<i64: 1, 512>}]} {
    %c0 = arith.constant 0 : index
    %c0_0 = arith.constant 0 : index
    %0 = vector.load %arg2[%c0, %c0_0] : memref<1x512xf32, #tpu.memory_space<vmem>>, vector<1x512xf32>
    %c0_1 = arith.constant 0 : index
    %1 = memref.load %arg1[%c0_1] : memref<4xf32, #tpu.memory_space<smem>>
    %2 = vector.broadcast %1 : f32 to vector<1x512xf32>
    %3 = arith.mulf %2, %0 : vector<1x512xf32>
    %c0_2 = arith.constant 0 : index
    %c0_3 = arith.constant 0 : index
    %4 = vector.load %arg3[%c0_2, %c0_3] : memref<1x512xf32, #tpu.memory_space<vmem>>, vector<1x512xf32>
    %c1 = arith.constant 1 : index
    %5 = memref.load %arg1[%c1] : memref<4xf32, #tpu.memory_space<smem>>
    %6 = vector.broadcast %5 : f32 to vector<1x512xf32>
    %7 = arith.mulf %6, %4 : vector<1x512xf32>
    %8 = arith.addf %3, %7 : vector<1x512xf32>
    %c0_4 = arith.constant 0 : index
    %c0_5 = arith.constant 0 : index
    %9 = vector.load %arg4[%c0_4, %c0_5] : memref<1x512xf32, #tpu.memory_space<vmem>>, vector<1x512xf32>
    %c2 = arith.constant 2 : index
    %10 = memref.load %arg1[%c2] : memref<4xf32, #tpu.memory_space<smem>>
    %11 = vector.broadcast %10 : f32 to vector<1x512xf32>
    %12 = arith.mulf %11, %9 : vector<1x512xf32>
    %13 = arith.addf %8, %12 : vector<1x512xf32>
    %c0_6 = arith.constant 0 : index
    %c0_7 = arith.constant 0 : index
    %14 = vector.load %arg5[%c0_6, %c0_7] : memref<1x512xf32, #tpu.memory_space<vmem>>, vector<1x512xf32>
    %c3 = arith.constant 3 : index
    %15 = memref.load %arg1[%c3] : memref<4xf32, #tpu.memory_space<smem>>
    %16 = vector.broadcast %15 : f32 to vector<1x512xf32>
    %17 = arith.mulf %16, %14 : vector<1x512xf32>
    %18 = arith.addf %13, %17 : vector<1x512xf32>
    %c0_8 = arith.constant 0 : index
    %c0_9 = arith.constant 0 : index
    %19 = vector.load %arg6[%c0_8, %c0_9] : memref<1x512xf32, #tpu.memory_space<vmem>>, vector<1x512xf32>
    tpu.vector_store %arg6[%c0_8, %c0_9], %18 {strides = array<i32>} : memref<1x512xf32, #tpu.memory_space<vmem>>, vector<1x512xf32>,
    return
  }
  func.func @transform_0(%arg0: i32, %arg1: memref<4xf32, #tpu.memory_space<smem>>) -> (i32, i32) {
    %c0_i32 = arith.constant 0 : i32
    %c0_i32_0 = arith.constant 0 : i32
    return %arg0, %c0_i32 : i32, i32
  }
  func.func @transform_1(%arg0: i32, %arg1: memref<4xf32, #tpu.memory_space<smem>>) -> (i32, i32) {
    %c0_i32 = arith.constant 0 : i32
    %c0_i32_0 = arith.constant 0 : i32
    return %arg0, %c0_i32 : i32, i32
  }
  func.func @transform_2(%arg0: i32, %arg1: memref<4xf32, #tpu.memory_space<smem>>) -> (i32, i32) {
    %c0_i32 = arith.constant 0 : i32
    %c0_i32_0 = arith.constant 0 : i32
    return %arg0, %c0_i32 : i32, i32
  }
  func.func @transform_3(%arg0: i32, %arg1: memref<4xf32, #tpu.memory_space<smem>>) -> (i32, i32) {
    %c0_i32 = arith.constant 0 : i32
    %c0_i32_0 = arith.constant 0 : i32
    return %arg0, %c0_i32 : i32, i32
  }
  func.func @transform_4(%arg0: i32, %arg1: memref<4xf32, #tpu.memory_space<smem>>) -> (i32, i32) {
    %c0_i32 = arith.constant 0 : i32
    %c0_i32_0 = arith.constant 0 : i32
    return %arg0, %c0_i32 : i32, i32
  }
}

</mosaic_0001>

<llo_original>
// kernel: tpu_custom_call.1
$region0: #{tpu_custom_call.1}
  #allocation0 [shape = 'u32[]', space=smem, size = 0x4, offset = 0x4, fixed_abs, tag = 'smem constant byte address 0x4 - core index']
  #allocation1 [shape = 'u32[72,128]{1,0:T(1,128)}', space=vmem, size = 0x9000, scoped, tag = 'internal scratch']
  #allocation2 [shape = 's32[1]{0}', space=sflag, size = 0x4, scoped, tag = 'scoped memory for tpu_custom_call.1']
  #allocation3 [shape = 'u8[512]{0}', space=smem, size = 0x200, scoped, tag = 'prefetched SMEM operand 0']
  %s0 = inlined_call_operand.hbm [shape: f32[4], index: 0, kind: input, shape index: {}]
  %s1 = inlined_call_operand.hbm [shape: f32[1,512], index: 1, kind: input, shape index: {}]
  %s2 = inlined_call_operand.hbm [shape: f32[1,512], index: 2, kind: input, shape index: {}]
  %s3 = inlined_call_operand.hbm [shape: f32[1,512], index: 3, kind: input, shape index: {}]
  %s4 = inlined_call_operand.hbm [shape: f32[1,512], index: 4, kind: input, shape index: {}]
  %s5 = inlined_call_operand.hbm [shape: f32[1,512], index: 5, kind: output, shape index: {}]
  %s6 = sld [smem:[#allocation0]]
  $region42: #{tpu_custom_call.1} parent=0
    _
  %s8 = ssub.s32 1, %s6
  %s9 = scalar_select 0, %s8, %s6
  %s11 = sshll.u32 %s0, 4
  %s12 = int_to_ptr.hbm [resolvable:$true] %s11
  %14 = dma.hbm_to_smem %s12, 16, [#allocation3], [#allocation2]
  %16 = dma.done [#allocation2], 16
  %17 = sfence
  $region1: #{tpu_custom_call.1} parent=0
    #allocation4 [shape = 'u8[2048]{0}', space=vmem, size = 0x800, scoped, tag = 'input window, operand 1, single buffered']
    #allocation5 [shape = 's32[1]{0}', space=sflag, size = 0x4, scoped, tag = 'scoped memory for tpu_custom_call.1']
    #allocation6 [shape = 's32[1]{0}', space=sflag, size = 0x4, scoped, tag = 'scoped memory for tpu_custom_call.1']
    #allocation7 [shape = 'u8[2048]{0}', space=vmem, size = 0x800, scoped, tag = 'input window, operand 2, single buffered']
    #allocation8 [shape = 's32[1]{0}', space=sflag, size = 0x4, scoped, tag = 'scoped memory for tpu_custom_call.1']
    #allocation9 [shape = 'u8[2048]{0}', space=vmem, size = 0x800, scoped, tag = 'input window, operand 3, single buffered']
    #allocation10 [shape = 'u8[2048]{0}', space=vmem, size = 0x800, scoped, tag = 'input window, operand 4, single buffered']
    #allocation11 [shape = 's32[1]{0}', space=sflag, size = 0x4, scoped, tag = 'scoped memory for tpu_custom_call.1']
    #allocation12 [shape = 'u8[2048]{0}', space=vmem, size = 0x800, scoped, tag = 'output window, operand 0, single buffered']
    %18 = vsyncpa [#allocation5], 0
    %19 = vsyncpa [#allocation8], 0
    %20 = vsyncpa [#allocation11], 0
    %21 = vsyncpa [#allocation6], 0
    // Predicated region
    $region2: #{tpu_custom_call.1} parent=1 // pred_check
      _
    $region3: #{tpu_custom_call.1} parent=1 // pred_check_branch
      %23 = sbr.rel (0) target = $region5
    $region4: #{tpu_custom_call.1} parent=1 // pred_region
      %25 = vsyncadd [#allocation5], 0
      %s27 = sshll.u32 %s1, 4
      %s28 = int_to_ptr.hbm [resolvable:$true] %s27
      %s29 = sshll.u32 [#allocation4], 4
      %s30 = int_to_ptr.vmem [resolvable:$true] %s29
      %32 = dma.hbm_to_vmem [thread:$0]  %s28, 64, %s30, [#allocation5]
    $region5: #{tpu_custom_call.1} parent=1 // pred_fallthru
      _
    // Predicated region
    $region6: #{tpu_custom_call.1} parent=1 // pred_check
      _
    $region7: #{tpu_custom_call.1} parent=1 // pred_check_branch
      %34 = sbr.rel (0) target = $region9
    $region8: #{tpu_custom_call.1} parent=1 // pred_region
      %36 = vsyncadd [#allocation8], 0
      %s38 = sshll.u32 %s2, 4
      %s39 = int_to_ptr.hbm [resolvable:$true] %s38
      %s40 = sshll.u32 [#allocation7], 4
      %s41 = int_to_ptr.vmem [resolvable:$true] %s40
      %43 = dma.hbm_to_vmem [thread:$0]  %s39, 64, %s41, [#allocation8]
    $region9: #{tpu_custom_call.1} parent=1 // pred_fallthru
      _
    // Predicated region
    $region10: #{tpu_custom_call.1} parent=1 // pred_check
      _
    $region11: #{tpu_custom_call.1} parent=1 // pred_check_branch
      %45 = sbr.rel (0) target = $region13
    $region12: #{tpu_custom_call.1} parent=1 // pred_region
      %47 = vsyncadd [#allocation8], 0
      %s49 = sshll.u32 %s3, 4
      %s50 = int_to_ptr.hbm [resolvable:$true] %s49
      %s51 = sshll.u32 [#allocation9], 4
      %s52 = int_to_ptr.vmem [resolvable:$true] %s51
      %54 = dma.hbm_to_vmem [thread:$0]  %s50, 64, %s52, [#allocation8]
    $region13: #{tpu_custom_call.1} parent=1 // pred_fallthru
      _
    // Predicated region
    $region14: #{tpu_custom_call.1} parent=1 // pred_check
      _
    $region15: #{tpu_custom_call.1} parent=1 // pred_check_branch
      %56 = sbr.rel (0) target = $region17
    $region16: #{tpu_custom_call.1} parent=1 // pred_region
      %58 = vsyncadd [#allocation11], 0
      %s60 = sshll.u32 %s4, 4
      %s61 = int_to_ptr.hbm [resolvable:$true] %s60
      %s62 = sshll.u32 [#allocation10], 4
      %s63 = int_to_ptr.vmem [resolvable:$true] %s62
      %65 = dma.hbm_to_vmem [thread:$0]  %s61, 64, %s63, [#allocation11]
    $region17: #{tpu_custom_call.1} parent=1 // pred_fallthru
      _
    // Predicated region
    $region18: #{tpu_custom_call.1} parent=1 // pred_check
      _
    $region19: #{tpu_custom_call.1} parent=1 // pred_check_branch
      %67 = sbr.rel (0) target = $region21
    $region20: #{tpu_custom_call.1} parent=1 // pred_region
      %69 = dma.done [#allocation5], 64
    $region21: #{tpu_custom_call.1} parent=1 // pred_fallthru
      _
    // Predicated region
    $region22: #{tpu_custom_call.1} parent=1 // pred_check
      _
    $region23: #{tpu_custom_call.1} parent=1 // pred_check_branch
      %71 = sbr.rel (0) target = $region25
    $region24: #{tpu_custom_call.1} parent=1 // pred_region
      %73 = dma.done [#allocation8], 64
    $region25: #{tpu_custom_call.1} parent=1 // pred_fallthru
      _
    // Predicated region
    $region26: #{tpu_custom_call.1} parent=1 // pred_check
      _
    $region27: #{tpu_custom_call.1} parent=1 // pred_check_branch
      %75 = sbr.rel (0) target = $region29
    $region28: #{tpu_custom_call.1} parent=1 // pred_region
      %77 = dma.done [#allocation8], 64
    $region29: #{tpu_custom_call.1} parent=1 // pred_fallthru
      _
    // Predicated region
    $region30: #{tpu_custom_call.1} parent=1 // pred_check
      _
    $region31: #{tpu_custom_call.1} parent=1 // pred_check_branch
      %79 = sbr.rel (0) target = $region33
    $region32: #{tpu_custom_call.1} parent=1 // pred_region
      %81 = dma.done [#allocation11], 64
    $region33: #{tpu_custom_call.1} parent=1 // pred_fallthru
      _
    %v82 = vld [vmem:[#allocation4] sm:$0xf]
    %s83 = sld [smem:[#allocation3]]
    %v84 = vstv %s83
    %v85 = vmul.f32 %v84, %v82
    %v86 = vld [vmem:[#allocation7] sm:$0xf]
    %s87 = sld [smem:[#allocation3 + $0x1]]
    %v88 = vstv %s87
    %v89 = vmul.f32 %v88, %v86
    %v90 = vadd.f32 %v85, %v89
    %v91 = vld [vmem:[#allocation9] sm:$0xf]
    %s92 = sld [smem:[#allocation3 + $0x2]]
    %v93 = vstv %s92
    %v94 = vmul.f32 %v93, %v91
    %v95 = vadd.f32 %v90, %v94
    %v96 = vld [vmem:[#allocation10] sm:$0xf]
    %s97 = sld [smem:[#allocation3 + $0x3]]
    %v98 = vstv %s97
    %v99 = vmul.f32 %v98, %v96
    %v100 = vadd.f32 %v95, %v99
    %v101 = vlaneseq
    %vm102 = vcmp.ge.s32.totalorder %v101, 0
    %vm103 = vcmp.lt.s32.totalorder %v101, 512
    %vm104 = vmand %vm102, %vm103
    %105 = vst.msk [vmem:[#allocation12] sm:$0xf] %vm104, %v100
    // Predicated region
    $region34: #{tpu_custom_call.1} parent=1 // pred_check
      _
    $region35: #{tpu_custom_call.1} parent=1 // pred_check_branch
      %107 = sbr.rel (0) target = $region37
    $region36: #{tpu_custom_call.1} parent=1 // pred_region
      %109 = vsyncadd [#allocation6], 0
      %s111 = sshll.u32 [#allocation12], 4
      %s112 = int_to_ptr.vmem [resolvable:$true] %s111
      %s113 = sshll.u32 %s5, 4
      %s114 = int_to_ptr.hbm [resolvable:$true] %s113
      %116 = dma.vmem_to_hbm [thread:$0]  %s112, 64, %s114, [#allocation6]
    $region37: #{tpu_custom_call.1} parent=1 // pred_fallthru
      _
    // Predicated region
    $region38: #{tpu_custom_call.1} parent=1 // pred_check
      _
    $region39: #{tpu_custom_call.1} parent=1 // pred_check_branch
      %118 = sbr.rel (0) target = $region41
    $region40: #{tpu_custom_call.1} parent=1 // pred_region
      %120 = dma.done [#allocation6], 64
    $region41: #{tpu_custom_call.1} parent=1 // pred_fallthru
      _
    %121 = vsyncpa [#allocation5], 1
    %122 = vsyncpa [#allocation8], 1
    %123 = vsyncpa [#allocation11], 1
    %124 = vsyncpa [#allocation6], 1

</llo_original>
